<compile_context>
chip_gen: v5e
topology: v5e:2x2
jax: 0.10.0
libtpu: 0.0.40
codegen_flags: <defaults>
</compile_context>

<pallas_src>
import functools

import jax
import jax.numpy as jnp
from jax.experimental import pallas as pl
from jax.experimental.pallas import tpu as pltpu


def _entropy_partial_kernel(x_ref, out_ref, *, eps, block_rows, total_rows,
                            needs_mask):
    """Per grid step: partial sum of x*log(x+eps) over this row tile.

    The reduction keeps the lane (last) axis so the output store is lane-dense
    and no big cross-lane reduce sits on the per-step path.
    """
    x = x_ref[...].astype(jnp.float32)
    plogp = x * jnp.log(x + eps)                       # VPU + EUP (log)
    if needs_mask:                                     # ragged tail tile only
        row0 = pl.program_id(0) * block_rows
        rid = jax.lax.broadcasted_iota(jnp.int32, plogp.shape, 0)
        plogp = jnp.where(row0 + rid < total_rows, plogp, 0.0)
    out_ref[...] = jnp.sum(plogp, axis=0, keepdims=True)   # (1, N) lane-shaped


def entropy_loss(x, eps=1e-12, *, block_rows=None,
                 target_tile_bytes=4 * 1024 * 1024):
    """Pallas implementation of EntropyLoss.forward.

    Works for any rank >= 2 input (matches PyTorch: sum over dim=1, mean over
    the remaining dims); the kernel itself runs on a 2-D (rows, N) view.
    """
    assert x.ndim >= 2
    # PyTorch result == -sum(x*log(x+eps)) / (numel / shape[1])
    denom = x.size // x.shape[1]

    N = x.shape[-1]
    x2 = x.reshape(-1, N)
    B = x2.shape[0]
    itemsize = x2.dtype.itemsize

    if block_rows is None:
        # Sublane packing granularity: 8 for f32, 16 for bf16, 32 for int8.
        pack = max(8, 32 // itemsize)
        rows = max(pack, target_tile_bytes // (N * itemsize))
        rows = (rows // pack) * pack
        block_rows = B if rows >= B else rows
    assert block_rows == B or block_rows % 8 == 0, (
        "block_rows must be a multiple of 8 or equal to the row count")

    grid_rows = pl.cdiv(B, block_rows)
    needs_mask = (B % block_rows) != 0

    kernel = functools.partial(
        _entropy_partial_kernel,
        eps=float(eps),          # Python scalar -> baked into the trace
        block_rows=int(block_rows),
        total_rows=int(B),
        needs_mask=bool(needs_mask),
    )

    partials = pl.pallas_call(
        kernel,
        out_shape=jax.ShapeDtypeStruct((grid_rows, 1, N), jnp.float32),
        grid_spec=pltpu.PrefetchScalarGridSpec(
            num_scalar_prefetch=0,
            grid=(grid_rows,),
            in_specs=[pl.BlockSpec((block_rows, N), lambda i: (i, 0))],
            # Leading grid dim squeezed; per-program (1, N) lane-dense block.
            out_specs=pl.BlockSpec((None, 1, N), lambda i: (i, 0, 0)),
        ),
        compiler_params=pltpu.CompilerParams(
            dimension_semantics=("parallel",),       # megacore on v7x
            vmem_limit_bytes=32 * 1024 * 1024,       # keeps big tiles portable
        ),
    )(x2)

    # Final cross-lane reduce + fused (-1/denom) scale, once, outside the loop.
    return jnp.sum(partials) * (-1.0 / denom)


if __name__ == "__main__":
    key = jax.random.PRNGKey(0)
    k0, k1 = jax.random.split(key)

    # Small, (8,128)-friendly shape; EntropyLoss is applied to softmax weights.
    B, N = 16, 128
    x = jax.nn.softmax(jax.random.normal(k0, (B, N), dtype=jnp.float32), axis=1)

    loss = jax.block_until_ready(entropy_loss(x, eps=1e-12))
    ref = jnp.mean(-jnp.sum(x * jnp.log(x + 1e-12), axis=1))
    assert jnp.allclose(loss, ref, rtol=1e-5, atol=1e-5), (loss, ref)

    # Also exercise the multi-block + ragged-tail (masked) path.
    B2 = 20
    x2 = jax.nn.softmax(jax.random.normal(k1, (B2, N), dtype=jnp.float32), axis=1)
    loss2 = jax.block_until_ready(entropy_loss(x2, eps=1e-12, block_rows=8))
    ref2 = jnp.mean(-jnp.sum(x2 * jnp.log(x2 + 1e-12), axis=1))
    assert jnp.allclose(loss2, ref2, rtol=1e-5, atol=1e-5), (loss2, ref2)

    print("KERNEL_OK")
</pallas_src>

<mosaic_0001>
module attributes {stable_mosaic.version = 11 : i64} {
  func.func @_entropy_partial_kernel(%arg0: i32, %arg1: memref<16x128xf32, #tpu.memory_space<vmem>>, %arg2: memref<1x1x128xf32, #tpu.memory_space<vmem>>) attributes {dimension_semantics = [#tpu.dimension_semantics<parallel>], iteration_bounds = array<i64: 1>, scalar_prefetch = 0 : i64, scratch_operands = 0 : i64, tpu.core_type = #tpu.core_type<tc>, window_params = [{transform_indices = @transform_0, window_bounds = array<i64: 16, 128>}, {transform_indices = @transform_1, window_bounds = array<i64: 1, 1, 128>}]} {
    %c0 = arith.constant 0 : index
    %c0_0 = arith.constant 0 : index
    %0 = vector.load %arg1[%c0, %c0_0] : memref<16x128xf32, #tpu.memory_space<vmem>>, vector<16x128xf32>
    %cst = arith.constant 9.99999996E-13 : f32
    %1 = vector.broadcast %cst : f32 to vector<16x128xf32>
    %2 = arith.addf %0, %1 : vector<16x128xf32>
    %3 = math.log %2 : vector<16x128xf32>
    %4 = arith.mulf %0, %3 : vector<16x128xf32>
    %cst_1 = arith.constant dense<0.000000e+00> : vector<128xf32>
    %5 = vector.multi_reduction <add>, %4, %cst_1 [0] : vector<16x128xf32> to vector<128xf32>
    %6 = vector.shape_cast %5 : vector<128xf32> to vector<1x128xf32>
    %c0_2 = arith.constant 0 : index
    %c0_3 = arith.constant 0 : index
    %c0_4 = arith.constant 0 : index
    %7 = vector.load %arg2[%c0_2, %c0_3, %c0_4] : memref<1x1x128xf32, #tpu.memory_space<vmem>>, vector<1x1x128xf32>
    %8 = vector.shape_cast %7 : vector<1x1x128xf32> to vector<1x128xf32>
    %9 = vector.shape_cast %6 : vector<1x128xf32> to vector<1x1x128xf32>
    tpu.vector_store %arg2[%c0_2, %c0_3, %c0_4], %9 {strides = array<i32>} : memref<1x1x128xf32, #tpu.memory_space<vmem>>, vector<1x1x128xf32>,
    return
  }
  func.func @transform_0(%arg0: i32) -> (i32, i32) {
    %c0_i32 = arith.constant 0 : i32
    %c0_i32_0 = arith.constant 0 : i32
    return %arg0, %c0_i32 : i32, i32
  }
  func.func @transform_1(%arg0: i32) -> (i32, i32, i32) {
    %c0_i32 = arith.constant 0 : i32
    %c0_i32_0 = arith.constant 0 : i32
    %c0_i32_1 = arith.constant 0 : i32
    return %arg0, %c0_i32, %c0_i32_0 : i32, i32, i32
  }
}

</mosaic_0001>

<llo_original>
// kernel: tpu_custom_call.1
$region0: #{tpu_custom_call.1}
  #allocation0 [shape = 'u32[]', space=smem, size = 0x4, offset = 0x4, fixed_abs, tag = 'smem constant byte address 0x4 - core index']
  #allocation1 [shape = 'u32[72,128]{1,0:T(1,128)}', space=vmem, size = 0x9000, scoped, tag = 'internal scratch']
  %s0 = inlined_call_operand.hbm [shape: f32[16,128], index: 0, kind: input, shape index: {}]
  %s1 = inlined_call_operand.hbm [shape: f32[1,1,128], index: 1, kind: output, shape index: {}]
  %s2 = sld [smem:[#allocation0]]
  $region18: #{tpu_custom_call.1} parent=0
    _
  %s4 = ssub.s32 1, %s2
  %s5 = scalar_select 0, %s4, %s2
  $region1: #{tpu_custom_call.1} parent=0
    #allocation2 [shape = 'u8[8192]{0}', space=vmem, size = 0x2000, scoped, tag = 'input window, operand 0, single buffered']
    #allocation3 [shape = 's32[1]{0}', space=sflag, size = 0x4, scoped, tag = 'scoped memory for tpu_custom_call.1']
    #allocation4 [shape = 's32[1]{0}', space=sflag, size = 0x4, scoped, tag = 'scoped memory for tpu_custom_call.1']
    #allocation5 [shape = 'u8[512]{0}', space=vmem, size = 0x400, scoped, tag = 'output window, operand 0, single buffered']
    %6 = vsyncpa [#allocation3], 0
    %7 = vsyncpa [#allocation4], 0
    // Predicated region
    $region2: #{tpu_custom_call.1} parent=1 // pred_check
      _
    $region3: #{tpu_custom_call.1} parent=1 // pred_check_branch
      %9 = sbr.rel (0) target = $region5
    $region4: #{tpu_custom_call.1} parent=1 // pred_region
      %11 = vsyncadd [#allocation3], 0
      %s12 = sshll.u32 %s0, 4
      %s13 = int_to_ptr.hbm [resolvable:$true] %s12
      %s14 = sshll.u32 [#allocation2], 4
      %s15 = int_to_ptr.vmem [resolvable:$true] %s14
      %20 = dma.hbm_to_vmem [thread:$0]  %s13, 256, %s15, [#allocation3], 128, 128, 8
    $region5: #{tpu_custom_call.1} parent=1 // pred_fallthru
      _
    // Predicated region
    $region6: #{tpu_custom_call.1} parent=1 // pred_check
      _
    $region7: #{tpu_custom_call.1} parent=1 // pred_check_branch
      %22 = sbr.rel (0) target = $region9
    $region8: #{tpu_custom_call.1} parent=1 // pred_region
      %24 = dma.done [#allocation3], 256
    $region9: #{tpu_custom_call.1} parent=1 // pred_fallthru
      _
    %v25 = vld [vmem:[#allocation2] sm:$0xff]
    %v26 = vld [vmem:[#allocation2 + $0x8] sm:$0xff]
    %v27 = vadd.f32 %v25, 1e-12
    %v28 = vadd.f32 %v26, 1e-12
    %v29 = vlog2.pop %v27
    %v30 = vmul.f32 %v29, 0.6931472
    %v31 = vlog2.pop %v28
    %v32 = vmul.f32 %v31, 0.6931472
    %v33 = vmul.f32 %v25, %v30
    %v34 = vmul.f32 %v26, %v32
    %v35 = vadd.f32 %v33, %v34
    %v36 = vrot.slane %v35, 4
    %v37 = vadd.f32 %v35, %v36
    %v38 = vrot.slane %v37, 2
    %v39 = vadd.f32 %v37, %v38
    %v40 = vrot.slane %v39, 1
    %v41 = vadd.f32 %v39, %v40
    %42 = vst [vmem:[#allocation5] sm:$0x1] %v41
    // Predicated region
    $region10: #{tpu_custom_call.1} parent=1 // pred_check
      _
    $region11: #{tpu_custom_call.1} parent=1 // pred_check_branch
      %44 = sbr.rel (0) target = $region13
    $region12: #{tpu_custom_call.1} parent=1 // pred_region
      %46 = vsyncadd [#allocation4], 0
      %s48 = sshll.u32 [#allocation5], 4
      %s49 = int_to_ptr.vmem [resolvable:$true] %s48
      %s50 = sshll.u32 %s1, 4
      %s51 = int_to_ptr.hbm [resolvable:$true] %s50
      %53 = dma.vmem_to_hbm [thread:$0]  %s49, 16, %s51, [#allocation4]
    $region13: #{tpu_custom_call.1} parent=1 // pred_fallthru
      _
    // Predicated region
    $region14: #{tpu_custom_call.1} parent=1 // pred_check
      _
    $region15: #{tpu_custom_call.1} parent=1 // pred_check_branch
      %55 = sbr.rel (0) target = $region17
    $region16: #{tpu_custom_call.1} parent=1 // pred_region
      %57 = dma.done [#allocation4], 16
    $region17: #{tpu_custom_call.1} parent=1 // pred_fallthru
      _
    %58 = vsyncpa [#allocation3], 1
    %59 = vsyncpa [#allocation4], 1

</llo_original>
